<compile_context>
chip_gen: v7x
topology: tpu7x:2x2x1
jax: 0.10.0
libtpu: 0.0.40
codegen_flags: <defaults>
</compile_context>

<pallas_src>
import math
from typing import NamedTuple, Optional

import jax
import jax.numpy as jnp
from jax import lax
from jax.experimental import pallas as pl
from jax.experimental.pallas import tpu as pltpu


_INV_SQRT2 = 0.7071067811865476
_MiB = 1024 * 1024


def _round_up(x, m):
    return ((x + m - 1) // m) * m


# --------------------------------------------------------------------------- #
# Kernels
# --------------------------------------------------------------------------- #
def _geglu_kernel_fused(x_ref, w_ref, b_ref, o_ref):
    """K un-tiled: one MXU pass produces both value and gate halves per tile."""
    tn = o_ref.shape[-1]
    y = jnp.dot(x_ref[...], w_ref[...], preferred_element_type=jnp.float32)
    y = y + b_ref[...]
    h = y[:, :tn]            # value half   (split lies on a 128-lane boundary)
    g = y[:, tn:]            # gate half
    gelu_g = 0.5 * g * (1.0 + lax.erf(g * _INV_SQRT2))   # exact erf GELU
    o_ref[...] = (h * gelu_g).astype(o_ref.dtype)


def _geglu_kernel_ktiled(x_ref, w_ref, b_ref, o_ref, acc_ref):
    """K tiled (innermost 'arbitrary' axis): accumulate into f32 VMEM scratch."""
    k = pl.program_id(2)

    @pl.when(k == 0)
    def _():
        acc_ref[...] = jnp.zeros_like(acc_ref)

    acc_ref[...] += jnp.dot(x_ref[...], w_ref[...],
                            preferred_element_type=jnp.float32)

    @pl.when(k == pl.num_programs(2) - 1)
    def _():
        tn = o_ref.shape[-1]
        y = acc_ref[...] + b_ref[...]
        h = y[:, :tn]
        g = y[:, tn:]
        gelu_g = 0.5 * g * (1.0 + lax.erf(g * _INV_SQRT2))
        o_ref[...] = (h * gelu_g).astype(o_ref.dtype)


# --------------------------------------------------------------------------- #
# Init-time planning + parameter packing (hoisted out of the forward call)
# --------------------------------------------------------------------------- #
def _vmem_budget():
    """Generation-aware (budget, vmem_limit) in bytes."""
    cap = 64 * _MiB  # conservative default: v7x per-TensorCore VMEM
    try:
        info = pltpu.get_tpu_info()
        cap = int(getattr(info, "vmem_capacity_bytes", cap) or cap)
    except Exception:
        pass
    if cap >= 96 * _MiB:                      # v5e / v6e: 128 MiB physical VMEM
        budget = 64 * _MiB
        vmem_limit = 100 * _MiB
    else:                                     # v7x: 64 MiB per TensorCore
        budget = max(min(40 * _MiB, cap - 24 * _MiB), 8 * _MiB)
        vmem_limit = min(max(cap - 8 * _MiB, 12 * _MiB), 56 * _MiB)
    return budget, vmem_limit


def _plan_tiles(Np, K, in_itemsize, out_itemsize, budget, tm_target,
                max_k_tile=None):
    """Pick (tm, tn, tk, ktiled): lane/sublane-dense tiles sized to the budget,
    preferring K-tiling over collapsing tm/tn when dim_in is large."""
    tn_candidates = [c for c in (1024, 512, 256, 128) if Np % c == 0]
    tm_target = max(8, (tm_target // 8) * 8)
    tm_candidates = sorted({min(c, tm_target) for c in (tm_target, 512, 256, 128)},
                           reverse=True)
    pairs = sorted({(tm, tn) for tm in tm_candidates for tn in tn_candidates},
                   key=lambda p: (p[0] * p[1], p[1]), reverse=True)

    def ws(tm, tn, tk, ktiled):
        s = 2 * tm * tk * in_itemsize          # x tiles (double-buffered)
        s += 2 * tk * 2 * tn * in_itemsize     # packed weight tiles
        s += 2 * 2 * tn * 4                    # packed bias tiles (f32)
        s += 2 * tm * tn * out_itemsize        # output tiles
        if ktiled:
            s += tm * 2 * tn * 4               # f32 accumulator scratch
        return s

    # Forced K tile (testing / explicit override).
    if max_k_tile is not None and max_k_tile < K:
        tk = max(128, (max_k_tile // 128) * 128)
        for tm, tn in pairs:
            if ws(tm, tn, tk, True) <= budget:
                return tm, tn, tk, True
        return tm_candidates[-1], tn_candidates[-1], tk, True

    # 1) Fused path: the full K slab stays in VMEM.
    for tm, tn in pairs:
        if ws(tm, tn, K, False) <= budget:
            return tm, tn, K, False

    # 2) K-tiled path (large dim_in): keep tm/tn large, bound the K slab.
    for min_tk in (512, 128):
        for tm, tn in pairs:
            fixed = 2 * 2 * tn * 4 + 2 * tm * tn * out_itemsize + tm * 2 * tn * 4
            per_k = 2 * in_itemsize * (tm + 2 * tn)
            tk = ((budget - fixed) // per_k // 128) * 128
            if tk < min_tk:
                continue
            tk = min(tk, _round_up(K, 128))
            # Prefer a tk that divides K (avoids zero-padding x along K), but
            # only if it costs at most half the tile.
            for cand in range(tk, tk // 2 - 1, -128):
                if cand >= 128 and K % cand == 0:
                    tk = cand
                    break
            return tm, tn, tk, True

    # 3) Last resort (tiny VMEM); may still spill but keeps lanes dense.
    return 8, tn_candidates[-1], 128, True


class GEGLUParams(NamedTuple):
    w_packed: jax.Array   # [Kp, 2*Np], per-tn-tile [value | gate] interleave
    b_packed: jax.Array   # [1, 2*Np], f32
    N: int
    Np: int
    K: int
    Kp: int
    tm: int
    tn: int
    tk: int
    ktiled: bool
    vmem_limit: int


def pack_geglu_params(weight, bias, *, tm_target=512,
                      compute_dtype=jnp.float32,
                      max_k_tile: Optional[int] = None) -> GEGLUParams:
    """Pack PyTorch nn.Linear(dim_in, 2*dim_out) params ONCE at module init.

    weight: [2*N, K] (PyTorch out_features x in_features); bias: [2*N].
    N is zero-padded up to a multiple of 128 (lane-dense output tiles); each
    tn-wide N tile of the packed weight is laid out as [value cols | gate cols]
    so the kernel splits the single [tm, 2*tn] matmul result on a lane-tile
    boundary. compute_dtype=jnp.bfloat16 halves DMA bytes and boosts MXU
    throughput (f32 accumulation is kept), at a small accuracy cost.
    """
    two_n, K = weight.shape
    N = two_n // 2
    in_itemsize = jnp.dtype(compute_dtype).itemsize
    budget, vmem_limit = _vmem_budget()

    Np = _round_up(max(N, 128), 128)
    tm, tn, tk, ktiled = _plan_tiles(Np, K, in_itemsize, 4, budget, tm_target,
                                     max_k_tile=max_k_tile)
    Kp = _round_up(K, tk) if ktiled else K
    n_tiles = Np // tn

    w_t = jnp.asarray(weight).T.astype(jnp.float32)       # [K, 2N]
    wx, wg = w_t[:, :N], w_t[:, N:]
    if Np != N:
        wx = jnp.pad(wx, ((0, 0), (0, Np - N)))
        wg = jnp.pad(wg, ((0, 0), (0, Np - N)))
    if Kp != K:
        wx = jnp.pad(wx, ((0, Kp - K), (0, 0)))
        wg = jnp.pad(wg, ((0, Kp - K), (0, 0)))
    wx = wx.reshape(Kp, n_tiles, tn)
    wg = wg.reshape(Kp, n_tiles, tn)
    w_packed = jnp.concatenate([wx, wg], axis=-1).reshape(Kp, 2 * Np)
    w_packed = w_packed.astype(compute_dtype)

    b = jnp.asarray(bias).astype(jnp.float32)
    bx, bg = b[:N], b[N:]
    if Np != N:
        bx = jnp.pad(bx, (0, Np - N))
        bg = jnp.pad(bg, (0, Np - N))
    bx = bx.reshape(n_tiles, tn)
    bg = bg.reshape(n_tiles, tn)
    b_packed = jnp.concatenate([bx, bg], axis=-1).reshape(1, 2 * Np)

    return GEGLUParams(w_packed=w_packed, b_packed=b_packed, N=N, Np=Np,
                       K=K, Kp=Kp, tm=tm, tn=tn, tk=tk, ktiled=ktiled,
                       vmem_limit=vmem_limit)


# --------------------------------------------------------------------------- #
# Forward
# --------------------------------------------------------------------------- #
def geglu(x, params: GEGLUParams):
    """x: [..., dim_in] -> [..., dim_out]."""
    lead = x.shape[:-1]
    K = x.shape[-1]
    assert K == params.K, (K, params.K)
    M = int(math.prod(lead)) if lead else 1
    out_dtype = x.dtype

    x2d = x.reshape(M, K)
    compute_dtype = params.w_packed.dtype
    if x2d.dtype != compute_dtype:
        x2d = x2d.astype(compute_dtype)
    if params.Kp != params.K:
        # TODO(synk): only hit for very large dim_in when no nice K-tile divides
        # dim_in; zero rows in the packed weight make the pad contribution exact.
        x2d = jnp.pad(x2d, ((0, 0), (0, params.Kp - params.K)))

    tn, tk, Np, Kp = params.tn, params.tk, params.Np, params.Kp
    tm = min(params.tm, _round_up(M, 8))       # sublane-aligned, ragged M is OK
    ni = pl.cdiv(M, tm)
    nj = Np // tn
    nk = Kp // tk

    # Keep the BIGGER operand tile resident across the innermost grid axis and
    # re-stream only the smaller one (review item #1).
    weight_resident = (2 * tn >= tm)

    if params.ktiled:
        kernel = _geglu_kernel_ktiled
        scratch = [pltpu.VMEM((tm, 2 * tn), jnp.float32)]
        sem = ("parallel", "parallel", "arbitrary")
        if weight_resident:
            grid = (nj, ni, nk)
            x_map = lambda j, i, k: (i, k)
            w_map = lambda j, i, k: (k, j)
            b_map = lambda j, i, k: (0, j)
            o_map = lambda j, i, k: (i, j)
        else:
            grid = (ni, nj, nk)
            x_map = lambda i, j, k: (i, k)
            w_map = lambda i, j, k: (k, j)
            b_map = lambda i, j, k: (0, j)
            o_map = lambda i, j, k: (i, j)
    else:
        kernel = _geglu_kernel_fused
        scratch = []
        sem = ("parallel", "parallel")
        if weight_resident:
            grid = (nj, ni)                     # M innermost: weight resident
            x_map = lambda j, i: (i, 0)
            w_map = lambda j, i: (0, j)
            b_map = lambda j, i: (0, j)
            o_map = lambda j, i: (i, j)
        else:
            grid = (ni, nj)                     # N innermost: x resident
            x_map = lambda i, j: (i, 0)
            w_map = lambda i, j: (0, j)
            b_map = lambda i, j: (0, j)
            o_map = lambda i, j: (i, j)

    in_itemsize = x2d.dtype.itemsize
    cost = pl.CostEstimate(
        flops=2 * M * Kp * 2 * Np,
        transcendentals=0,   # exact erf lowers to a VPU polynomial, not an EUP op
        bytes_accessed=(in_itemsize * (M * Kp + Kp * 2 * Np)
                        + 4 * 2 * Np + out_dtype.itemsize * M * Np),
    )

    # TODO(synk): if the re-streamed tile's DMA is still exposed at large K,
    # sweep pipeline_mode=pl.Buffered(3) on that BlockSpec (extra buffer must
    # fit the v7x VMEM budget).
    out = pl.pallas_call(
        kernel,
        out_shape=jax.ShapeDtypeStruct((M, Np), out_dtype),
        grid=grid,
        in_specs=[
            pl.BlockSpec((tm, tk), x_map),          # x tile
            pl.BlockSpec((tk, 2 * tn), w_map),      # packed [value|gate] weight tile
            pl.BlockSpec((1, 2 * tn), b_map),       # packed bias tile (f32)
        ],
        out_specs=pl.BlockSpec((tm, tn), o_map),
        scratch_shapes=scratch,
        compiler_params=pltpu.CompilerParams(
            dimension_semantics=sem,
            vmem_limit_bytes=params.vmem_limit,
        ),
        cost_estimate=cost,
    )(x2d, params.w_packed, params.b_packed)

    if Np != params.N:
        out = out[:, :params.N]                     # drop lane padding (small N only)
    return out.reshape(*lead, params.N)


# --------------------------------------------------------------------------- #
# Reference + self-test
# --------------------------------------------------------------------------- #
def _reference(x, weight, bias):
    y = x @ weight.T + bias
    n = weight.shape[0] // 2
    val, gate = y[..., :n], y[..., n:]
    return val * jax.nn.gelu(gate, approximate=False)


if __name__ == "__main__":
    key = jax.random.PRNGKey(0)

    def make_case(k, B, S, dim_in, dim_out):
        kx, kw, kb = jax.random.split(k, 3)
        x = jax.random.normal(kx, (B, S, dim_in), dtype=jnp.float32)
        bound = 1.0 / math.sqrt(dim_in)
        weight = jax.random.uniform(kw, (2 * dim_out, dim_in),
                                    minval=-bound, maxval=bound, dtype=jnp.float32)
        bias = jax.random.uniform(kb, (2 * dim_out,),
                                  minval=-bound, maxval=bound, dtype=jnp.float32)
        return x, weight, bias

    def check(x, weight, bias, **pack_kwargs):
        # Pack once ("module init"), then run the forward.
        params = pack_geglu_params(weight, bias, **pack_kwargs)
        out = jax.block_until_ready(geglu(x, params))
        ref = _reference(x, weight, bias)
        assert out.shape == ref.shape, (out.shape, ref.shape)
        err = float(jnp.max(jnp.abs(out - ref)))
        assert jnp.allclose(out, ref, atol=2e-5, rtol=2e-5), err

    k1, k2, k3 = jax.random.split(key, 3)

    # 1) Small module-consistent shape: N padded to one lane tile (64 -> 128),
    #    weight-resident ordering, fused (K un-tiled) path.
    check(*make_case(k1, 2, 8, 32, 64))

    # 2) Ragged last M tile (M=640, tm=512) + x-resident ordering (tm > 2*tn):
    #    exercises masked output writeback without any host-side padding.
    check(*make_case(k2, 4, 160, 32, 64))

    # 3) K-tiled accumulator path (forced small K tile so it runs at small shapes):
    #    pl.when init / bias+GELU finalize over an "arbitrary" K grid axis.
    check(*make_case(k3, 2, 200, 256, 256), max_k_tile=128)

    print("KERNEL_OK")
</pallas_src>

<mosaic_0001>
module attributes {stable_mosaic.version = 11 : i64} {
  func.func @_geglu_kernel_fused(%arg0: i32, %arg1: i32, %arg2: memref<16x32xf32, #tpu.memory_space<vmem>>, %arg3: memref<32x256xf32, #tpu.memory_space<vmem>>, %arg4: memref<1x256xf32, #tpu.memory_space<vmem>>, %arg5: memref<16x128xf32, #tpu.memory_space<vmem>>) attributes {dimension_semantics = [#tpu.dimension_semantics<parallel>, #tpu.dimension_semantics<parallel>], iteration_bounds = array<i64: 1, 1>, scalar_prefetch = 0 : i64, scratch_operands = 0 : i64, tpu.core_type = #tpu.core_type<tc>, window_params = [{transform_indices = @transform_0, window_bounds = array<i64: 16, 32>}, {transform_indices = @transform_1, window_bounds = array<i64: 32, 256>}, {transform_indices = @transform_2, window_bounds = array<i64: 1, 256>}, {transform_indices = @transform_3, window_bounds = array<i64: 16, 128>}]} {
    %c0 = arith.constant 0 : index
    %c0_0 = arith.constant 0 : index
    %0 = vector.load %arg2[%c0, %c0_0] : memref<16x32xf32, #tpu.memory_space<vmem>>, vector<16x32xf32>
    %c0_1 = arith.constant 0 : index
    %c0_2 = arith.constant 0 : index
    %1 = vector.load %arg3[%c0_1, %c0_2] : memref<32x256xf32, #tpu.memory_space<vmem>>, vector<32x256xf32>
    %cst = arith.constant dense<0.000000e+00> : vector<16x256xf32>
    %2 = tpu.matmul %0, %1, %cst {dimension_numbers = #tpu.dot_dimension_numbers<[1], [0], [0], [1], [0, 0, 1, 1], [], []>} : vector<16x32xf32>, vector<32x256xf32>, vector<16x256xf32> -> vector<16x256xf32>
    %c0_3 = arith.constant 0 : index
    %c0_4 = arith.constant 0 : index
    %3 = vector.load %arg4[%c0_3, %c0_4] : memref<1x256xf32, #tpu.memory_space<vmem>>, vector<1x256xf32>
    %4 = vector.broadcast %3 : vector<1x256xf32> to vector<16x256xf32>
    %5 = arith.addf %2, %4 : vector<16x256xf32>
    %6 = vector.extract_strided_slice %5 {offsets = [0, 0], sizes = [16, 128], strides = [1, 1]} : vector<16x256xf32> to vector<16x128xf32>
    %7 = vector.extract_strided_slice %5 {offsets = [0, 128], sizes = [16, 128], strides = [1, 1]} : vector<16x256xf32> to vector<16x128xf32>
    %cst_5 = arith.constant 5.000000e-01 : f32
    %8 = vector.broadcast %cst_5 : f32 to vector<16x128xf32>
    %9 = arith.mulf %8, %7 : vector<16x128xf32>
    %cst_6 = arith.constant 0.707106769 : f32
    %10 = vector.broadcast %cst_6 : f32 to vector<16x128xf32>
    %11 = arith.mulf %7, %10 : vector<16x128xf32>
    %12 = math.erf %11 : vector<16x128xf32>
    %cst_7 = arith.constant 1.000000e+00 : f32
    %13 = vector.broadcast %cst_7 : f32 to vector<16x128xf32>
    %14 = arith.addf %13, %12 : vector<16x128xf32>
    %15 = arith.mulf %9, %14 : vector<16x128xf32>
    %16 = arith.mulf %6, %15 : vector<16x128xf32>
    %c0_8 = arith.constant 0 : index
    %c0_9 = arith.constant 0 : index
    %17 = vector.load %arg5[%c0_8, %c0_9] : memref<16x128xf32, #tpu.memory_space<vmem>>, vector<16x128xf32>
    tpu.vector_store %arg5[%c0_8, %c0_9], %16 {strides = array<i32>} : memref<16x128xf32, #tpu.memory_space<vmem>>, vector<16x128xf32>,
    return
  }
  func.func @transform_0(%arg0: i32, %arg1: i32) -> (i32, i32) {
    %c0_i32 = arith.constant 0 : i32
    %c0_i32_0 = arith.constant 0 : i32
    return %arg1, %c0_i32 : i32, i32
  }
  func.func @transform_1(%arg0: i32, %arg1: i32) -> (i32, i32) {
    %c0_i32 = arith.constant 0 : i32
    %c0_i32_0 = arith.constant 0 : i32
    return %c0_i32, %arg0 : i32, i32
  }
  func.func @transform_2(%arg0: i32, %arg1: i32) -> (i32, i32) {
    %c0_i32 = arith.constant 0 : i32
    %c0_i32_0 = arith.constant 0 : i32
    return %c0_i32, %arg0 : i32, i32
  }
  func.func @transform_3(%arg0: i32, %arg1: i32) -> (i32, i32) {
    %c0_i32 = arith.constant 0 : i32
    return %arg1, %arg0 : i32, i32
  }
}

</mosaic_0001>

<llo_original>
// kernel: tpu_custom_call.1
$region0: #{tpu_custom_call.1}
  #allocation0 [shape = 'u32[]', space=smem, size = 0x4, offset = 0x4, fixed_abs, tag = 'smem constant byte address 0x4 - core index']
  #allocation1 [shape = 'u32[144,128]{1,0:T(1,128)}', space=vmem, size = 0x12000, scoped, tag = 'internal scratch']
  %s0 = inlined_call_operand.hbm [shape: f32[16,32], index: 0, kind: input, shape index: {}]
  %s1 = inlined_call_operand.hbm [shape: f32[32,256], index: 1, kind: input, shape index: {}]
  %s2 = inlined_call_operand.vmem [shape: f32[1,256], index: 2, kind: input, shape index: {}]
  %s3 = inlined_call_operand.hbm [shape: f32[16,128], index: 3, kind: output, shape index: {}]
  %s4 = sld [smem:[#allocation0]]
  $region30: #{tpu_custom_call.1} parent=0
    _
  %s6 = ssub.s32 1, %s4
  %s7 = scalar_select 0, %s6, %s4
  $region1: #{tpu_custom_call.1} parent=0
    #allocation2 [shape = 'u8[8192]{0}', space=vmem, size = 0x2000, scoped, tag = 'input window, operand 0, single buffered']
    #allocation3 [shape = 's32[1]{0}', space=sflag, size = 0x4, scoped, tag = 'scoped memory for tpu_custom_call.1']
    #allocation4 [shape = 's32[1]{0}', space=sflag, size = 0x4, scoped, tag = 'scoped memory for tpu_custom_call.1']
    #allocation5 [shape = 'u8[32768]{0}', space=vmem, size = 0x8000, scoped, tag = 'input window, operand 1, single buffered']
    #allocation6 [shape = 's32[1]{0}', space=sflag, size = 0x4, scoped, tag = 'scoped memory for tpu_custom_call.1']
    #allocation7 [shape = 'u8[8192]{0}', space=vmem, size = 0x2000, scoped, tag = 'output window, operand 0, single buffered']
    %8 = vsyncpa [#allocation3], 0
    %9 = vsyncpa [#allocation6], 0
    %10 = vsyncpa [#allocation4], 0
    // Predicated region
    $region2: #{tpu_custom_call.1} parent=1 // pred_check
      _
    $region3: #{tpu_custom_call.1} parent=1 // pred_check_branch
      %12 = sbr.rel (0) target = $region5
    $region4: #{tpu_custom_call.1} parent=1 // pred_region
      %s14 = ssub.s32 256, 256
      %15 = vsyncadd [#allocation3], %s14
      %s16 = sshll.u32 [#allocation2], 4
      %s17 = int_to_ptr.vmem [resolvable:$true] %s16
      %22 = dma.hbm_to_vmem [thread:$0]  %s0, 256, %s17, [#allocation3], 128, 128, 8
    $region5: #{tpu_custom_call.1} parent=1 // pred_fallthru
      _
    // Predicated region
    $region6: #{tpu_custom_call.1} parent=1 // pred_check
      _
    $region7: #{tpu_custom_call.1} parent=1 // pred_check_branch
      %24 = sbr.rel (0) target = $region9
    $region8: #{tpu_custom_call.1} parent=1 // pred_region
      %s26 = ssub.s32 1024, 1024
      %27 = vsyncadd [#allocation6], %s26
      %s28 = sshll.u32 [#allocation5], 4
      %s29 = int_to_ptr.vmem [resolvable:$true] %s28
      %34 = dma.hbm_to_vmem [thread:$0]  %s1, 1024, %s29, [#allocation6], 256, 256, 16
    $region9: #{tpu_custom_call.1} parent=1 // pred_fallthru
      _
    // Predicated region
    $region10: #{tpu_custom_call.1} parent=1 // pred_check
      _
    $region11: #{tpu_custom_call.1} parent=1 // pred_check_branch
      %36 = sbr.rel (0) target = $region13
    $region12: #{tpu_custom_call.1} parent=1 // pred_region
      _
    $region13: #{tpu_custom_call.1} parent=1 // pred_fallthru
      _
    // Predicated region
    $region14: #{tpu_custom_call.1} parent=1 // pred_check
      _
    $region15: #{tpu_custom_call.1} parent=1 // pred_check_branch
      %38 = sbr.rel (0) target = $region17
    $region16: #{tpu_custom_call.1} parent=1 // pred_region
      %39 = dma.done [#allocation3], 256
    $region17: #{tpu_custom_call.1} parent=1 // pred_fallthru
      _
    // Predicated region
    $region18: #{tpu_custom_call.1} parent=1 // pred_check
      _
    $region19: #{tpu_custom_call.1} parent=1 // pred_check_branch
      %41 = sbr.rel (0) target = $region21
    $region20: #{tpu_custom_call.1} parent=1 // pred_region
      %42 = dma.done [#allocation6], 1024
    $region21: #{tpu_custom_call.1} parent=1 // pred_fallthru
      _
    %v43 = vld [vmem:[#allocation2] sm:$0xff]
    %v44 = vld [vmem:[#allocation2 + $0x8] sm:$0xff]
    %v45 = vld [vmem:[#allocation5] sm:$0xff]
    %v46 = vld [vmem:[#allocation5 + $0x8] sm:$0xff]
    %v47 = vld [vmem:[#allocation5 + $0x10] sm:$0xff]
    %v48 = vld [vmem:[#allocation5 + $0x18] sm:$0xff]
    %v49 = vld [vmem:[#allocation5 + $0x20] sm:$0xff]
    %v50 = vld [vmem:[#allocation5 + $0x28] sm:$0xff]
    %v51 = vld [vmem:[#allocation5 + $0x30] sm:$0xff]
    %v52 = vld [vmem:[#allocation5 + $0x38] sm:$0xff]
    %v53 = vld [vmem:[%s2] sm:$0x3]
    %v55 = vlaneseq
    %v56 = vshrl.u32 %v55, 7
    %v57 = vsub.s32 0, %v56
    %v58 = vrot.slane %v53, %v57
    %v59 = vlaneseq
    %v60 = vshrl.u32 %v59, 7
    %v61 = vsub.s32 1, %v60
    %v62 = vrot.slane %v53, %v61
    %vm65 = vcmask 261120
    %v67 = vsel %vm65, %v43, 0
    %v70 = vsel %vm65, %v44, 0
    %72 = vmatprep.subr.mxu0 %v46
    %73 = vmatpush1.msra.mxu0 %v45
    %74 = vmatprep.subr.mxu0 %v48
    %75 = vmatpush1.msra.mxu0 %v47
    %76 = vmatprep.subr.mxu0 %v50
    %77 = vmatpush1.msra.mxu0 %v49
    %78 = vmatprep.subr.mxu0 %v52
    %79 = vmatpush1.msra.mxu0 %v51
    %80 = vmatprep.subr.mxu0 0.0
    %81 = vmatpush1.msra.mxu0 0.0
    %82 = vmatprep.subr.mxu0 0.0
    %83 = vmatpush1.msra.mxu0 0.0
    %84 = vmatprep.subr.mxu0 0.0
    %85 = vmatpush1.msra.mxu0 0.0
    %86 = vmatprep.subr.mxu0 0.0
    %87 = vmatpush1.msra.mxu0 0.0
    %88 = vmatprep.subr.mxu0 0.0
    %89 = vmatpush1.msra.mxu0 0.0
    %90 = vmatprep.subr.mxu0 0.0
    %91 = vmatpush1.msra.mxu0 0.0
    %92 = vmatprep.subr.mxu0 0.0
    %93 = vmatpush1.msra.mxu0 0.0
    %94 = vmatprep.subr.mxu0 0.0
    %95 = vmatpush1.msra.mxu0 0.0
    %96 = vmatprep.subr.mxu0 0.0
    %97 = vmatpush1.msra.mxu0 0.0
    %98 = vmatprep.subr.mxu0 0.0
    %99 = vmatpush1.msra.mxu0 0.0
    %100 = vmatprep.subr.mxu0 0.0
    %101 = vmatpush1.msra.mxu0 0.0
    %102 = vmatprep.subr.mxu0 0.0
    %103 = vmatpush1.msra.mxu0 0.0
    %104 = vmatprep.subr.mxu0 0.0
    %105 = vmatpush1.msra.mxu0 0.0
    %106 = vmatprep.subr.mxu0 0.0
    %107 = vmatpush1.msra.mxu0 0.0
    %108 = vmatprep.subr.mxu0 0.0
    %109 = vmatpush1.msra.mxu0 0.0
    %110 = vmatprep.subr.mxu0 0.0
    %111 = vmatpush1.msra.mxu0 0.0
    %112 = vmatprep.subr.mxu0 0.0
    %113 = vmatpush1.msra.mxu0 0.0
    %114 = vmatprep.subr.mxu0 0.0
    %115 = vmatpush1.msra.mxu0 0.0
    %116 = vmatprep.subr.mxu0 0.0
    %117 = vmatpush1.msra.mxu0 0.0
    %118 = vmatprep.subr.mxu0 0.0
    %119 = vmatpush1.msra.mxu0 0.0
    %120 = vmatprep.subr.mxu0 0.0
    %121 = vmatpush1.msra.mxu0 0.0
    %122 = vmatprep.subr.mxu0 0.0
    %123 = vmatpush1.msra.mxu0 0.0
    %124 = vmatprep.subr.mxu0 0.0
    %125 = vmatpush1.msra.mxu0 0.0
    %126 = vmatprep.subr.mxu0 0.0
    %127 = vmatpush1.msra.mxu0 0.0
    %128 = vmatprep.subr.mxu0 0.0
    %129 = vmatpush1.msra.mxu0 0.0
    %130 = vmatprep.subr.mxu0 0.0
    %131 = vmatpush1.msra.mxu0 0.0
    %132 = vmatprep.subr.mxu0 0.0
    %133 = vmatpush1.msra.mxu0 0.0
    %134 = vmatprep.subr.mxu0 0.0
    %135 = vmatpush1.msra.mxu0 0.0
    %136 = vmatprep.mubr.f32.mxu0 0.0
    %137 = vmatmul.mubr.f32.gmra.mrb[0].mxu0 %v67
    %v138 = vpop.f32.mrb[0].mxu0
    %v139 = vadd.f32 %v58, %v138
    %v140 = vpop.f32.mrb[0].mxu0
    %v141 = vadd.f32 %v62, %v140
    %142 = vmatprep.mubr.f32.mxu0 0.0
    %143 = vmatmul.mubr.f32.gmra.mrb[0].mxu0 %v70
    %v144 = vpop.f32.mrb[0].mxu0
    %v145 = vadd.f32 %v58, %v144
    %v146 = vpop.f32.mrb[0].mxu0
    %v147 = vadd.f32 %v62, %v146
    %148 = vdwg.mxu0
    %v149 = vmul.f32 %v141, 0.5
    %v150 = vmul.f32 %v147, 0.5
    %v151 = vmul.f32 %v141, 0.70710677
    %v152 = vmul.f32 %v147, 0.70710677
    %v153 = verf.f32.pop %v151
    %v154 = verf.f32.pop %v152
    %v155 = vadd.f32 %v153, 1.0
    %v156 = vadd.f32 %v154, 1.0
    %v157 = vmul.f32 %v149, %v155
    %v158 = vmul.f32 %v150, %v156
    %v159 = vmul.f32 %v139, %v157
    %v160 = vmul.f32 %v145, %v158
    %161 = vst [vmem:[#allocation7] sm:$0xff] %v159
    %162 = vst [vmem:[#allocation7 + $0x8] sm:$0xff] %v160
    // Predicated region
    $region22: #{tpu_custom_call.1} parent=1 // pred_check
      _
    $region23: #{tpu_custom_call.1} parent=1 // pred_check_branch
      %164 = sbr.rel (0) target = $region25
    $region24: #{tpu_custom_call.1} parent=1 // pred_region
      %s166 = ssub.s32 256, 256
      %167 = vsyncadd [#allocation4], %s166
      %s168 = sshll.u32 [#allocation7], 4
      %s169 = int_to_ptr.vmem [resolvable:$true] %s168
      %174 = dma.vmem_to_hbm [thread:$0]  %s169, 256, %s3, [#allocation4], 128, 128, 8
    $region25: #{tpu_custom_call.1} parent=1 // pred_fallthru
      _
    // Predicated region
    $region26: #{tpu_custom_call.1} parent=1 // pred_check
      _
    $region27: #{tpu_custom_call.1} parent=1 // pred_check_branch
      %176 = sbr.rel (0) target = $region29
    $region28: #{tpu_custom_call.1} parent=1 // pred_region
      %177 = dma.done [#allocation4], 256
    $region29: #{tpu_custom_call.1} parent=1 // pred_fallthru
      _
    %178 = vsyncpa [#allocation3], 1
    %179 = vsyncpa [#allocation6], 1
    %180 = vsyncpa [#allocation4], 1

</llo_original>
